<compile_context>
chip_gen: v6e
topology: v6e:2x2x1
jax: 0.10.0
libtpu: 0.0.40
codegen_flags: <defaults>
</compile_context>

<pallas_src>
import functools

import jax
import jax.numpy as jnp
from jax.experimental import pallas as pl
from jax.experimental.pallas import tpu as pltpu


def _round_up(x, m):
    return (x + m - 1) // m * m


def _ms_conv_kernel(feat_ref, w1_ref, w2_ref, b2_ref, o_ref, *, num_scales, k_neigh):
    """Shared PointNet-style conv for all scales of one M-tile.

    feat_ref: [S, K, TM, F]  bf16   (k-major slabs; bias ones-column folded into F)
    w1_ref:   [F, H]         bf16   (last row is b1)
    w2_ref:   [H, C]         bf16
    b2_ref:   [1, C]         f32
    o_ref:    [TM, S*C]      f32    (lane-dense, scales concatenated)
    """
    _, K, TM, F = feat_ref.shape
    C = w2_ref.shape[1]
    w1 = w1_ref[...]
    w2 = w2_ref[...]
    b2 = b2_ref[...]

    outs = []
    for s in range(num_scales):                       # static, tiny (num_scales)
        # One big matmul pair per scale instead of K tiny ones.
        f2d = feat_ref[s].reshape(K * TM, F)          # layout-trivial merge (TM % 16 == 0)
        h = jnp.maximum(
            jnp.dot(f2d, w1, preferred_element_type=jnp.float32), 0.0)
        h2 = jnp.maximum(
            jnp.dot(h.astype(w2.dtype), w2, preferred_element_type=jnp.float32) + b2,
            0.0)                                      # [K*TM, C] f32
        # Max-pool over the neighbourhood: K tile-aligned row-slabs, VPU max-tree.
        pooled = h2[0:TM]
        for k in range(1, k_neigh):
            pooled = jnp.maximum(pooled, h2[k * TM:(k + 1) * TM])
        outs.append(pooled)

    o_ref[...] = jnp.concatenate(outs, axis=-1).astype(o_ref.dtype)


def pointnet_ms_conv_pallas(feat, w1_aug, w2, b2, *, tile_m=256):
    """feat: [S, K, M, F] grouped features (bf16) -> [M, S*C_out] f32."""
    S, K, M, F = feat.shape
    H = w1_aug.shape[1]
    C = w2.shape[1]

    # Keep tile_m a multiple of 16 (bf16 sublane tile) and pad M instead of asserting.
    tile_m = max(16, min(tile_m, _round_up(M, 16)))
    Mp = _round_up(M, tile_m)
    if Mp != M:
        feat = jnp.pad(feat, ((0, 0), (0, 0), (0, Mp - M), (0, 0)))

    # VMEM budget (per step, double-buffered feat): 2*S*K*tile_m*F*2B — a few hundred
    # KB at these shapes, well under the 32 MiB default scoped limit on every gen.
    # NOTE(v7x): for large clouds Mp//tile_m >= 2, so the "parallel" axis still
    # shards across the 2 TensorCores; at the tiny demo M the grid is 1 by necessity.
    kernel = functools.partial(_ms_conv_kernel, num_scales=S, k_neigh=K)
    out = pl.pallas_call(
        kernel,
        out_shape=jax.ShapeDtypeStruct((Mp, S * C), jnp.float32),
        grid_spec=pltpu.PrefetchScalarGridSpec(
            num_scalar_prefetch=0,
            grid=(Mp // tile_m,),
            in_specs=[
                pl.BlockSpec((S, K, tile_m, F), lambda i: (0, 0, i, 0)),
                pl.BlockSpec((F, H), lambda i: (0, 0)),
                pl.BlockSpec((H, C), lambda i: (0, 0)),
                pl.BlockSpec((1, C), lambda i: (0, 0)),
            ],
            out_specs=pl.BlockSpec((tile_m, S * C), lambda i: (i, 0)),
        ),
        compiler_params=pltpu.CompilerParams(
            dimension_semantics=("parallel",)),
    )(feat, w1_aug, w2, b2)
    return out[:M]


def base_ms_convolution_down_forward(x, pos, batch, params, *, num_sampled, ks):
    """Mirrors BaseMSConvolutionDown.forward.

    Returns (batch_obj.x, batch_obj.pos, batch_obj.batch, batch_obj.idx).
    """
    w1, b1, w2, b2 = params
    N = pos.shape[0]

    # --- sampler: strided subsampling of the input cloud ---
    stride = N // num_sampled
    idx = jnp.arange(0, N, stride)[:num_sampled]          # [M]
    pos_q = pos[idx]
    batch_q = batch[idx]
    M = num_sampled

    K_max = max(ks)
    feat_scales = []
    for K in ks:                                          # neighbour_finder.num_scales
        # --- multiscale neighbour finder: batch-aware KNN (glue, plain JAX) ---
        d2 = jnp.sum((pos_q[:, None, :] - pos[None, :, :]) ** 2, axis=-1)   # [M, N]
        same_batch = batch_q[:, None] == batch[None, :]
        d2 = jnp.where(same_batch, d2, jnp.inf)
        _, neigh = jax.lax.top_k(-d2, K)                  # [M, K]
        # TODO(synk): if a query has < K same-batch points, top_k can return
        # cross-batch fillers; mask those neighbours if such clouds are expected.
        if K < K_max:
            # Pad to K_max by duplicating the nearest neighbour: no-op under max-pool.
            neigh = jnp.concatenate(
                [neigh, jnp.tile(neigh[:, :1], (1, K_max - K))], axis=1)

        # --- grouping: concat(x_j, pos_j - pos_i, 1)  (ones column folds in b1) ---
        xj = x[neigh]                                     # [M, K_max, C_in]
        pj = pos[neigh] - pos_q[:, None, :]               # [M, K_max, 3]
        ones = jnp.ones(xj.shape[:2] + (1,), jnp.float32)
        feat = jnp.concatenate([xj, pj, ones], axis=-1)   # [M, K_max, C_in+3+1]
        feat_scales.append(jnp.transpose(feat, (1, 0, 2)))  # k-major: [K_max, M, F]

    feat_all = jnp.stack(feat_scales, axis=0).astype(jnp.bfloat16)  # [S, K_max, M, F]

    # Shared conv-kernel params: fold b1 into w1 (matches the ones-column), bf16 matmuls.
    w1_aug = jnp.concatenate([w1, b1], axis=0).astype(jnp.bfloat16)  # [F, H]
    w2_bf = w2.astype(jnp.bfloat16)
    b2_f32 = b2.astype(jnp.float32)

    # --- conv: shared-kernel MLP + max pool for ALL scales, in one Pallas call ---
    out_x = pointnet_ms_conv_pallas(feat_all, w1_aug, w2_bf, b2_f32)  # [M, S*C_out]

    # TODO(synk): copy_from_to(data, batch_obj) only forwards untouched attributes.
    return out_x, pos_q, batch_q, idx


if __name__ == "__main__":
    key = jax.random.PRNGKey(0)
    k_x, k_pos, k_w1, k_b1, k_w2, k_b2 = jax.random.split(key, 6)

    # Small, module-consistent shapes.
    N, C_in = 64, 4          # input point cloud
    M = 16                   # sampled ("down") points
    ks = (4, 8)              # neighbours per scale (num_scales = 2)
    H, C_out = 32, 32        # shared MLP sizes
    F = C_in + 3

    x = jax.random.normal(k_x, (N, C_in), dtype=jnp.float32)
    pos = jax.random.normal(k_pos, (N, 3), dtype=jnp.float32)
    batch = jnp.concatenate([jnp.zeros((N // 2,), jnp.int32),
                             jnp.ones((N - N // 2,), jnp.int32)])

    # Deterministic shared conv-kernel parameters (shared across scales).
    w1 = jax.random.normal(k_w1, (F, H), dtype=jnp.float32) * 0.1
    b1 = jax.random.normal(k_b1, (1, H), dtype=jnp.float32) * 0.1
    w2 = jax.random.normal(k_w2, (H, C_out), dtype=jnp.float32) * 0.1
    b2 = jax.random.normal(k_b2, (1, C_out), dtype=jnp.float32) * 0.1
    params = (w1, b1, w2, b2)

    out_x, out_pos, out_batch, out_idx = base_ms_convolution_down_forward(
        x, pos, batch, params, num_sampled=M, ks=ks)
    jax.block_until_ready(out_x)

    # Pure-JAX reference for the Pallas conv path (bf16-rounded operands, f32 accum).
    pos_q = pos[out_idx]
    batch_q = batch[out_idx]
    w1_aug_r = jnp.concatenate([w1, b1], axis=0).astype(jnp.bfloat16).astype(jnp.float32)
    w2_r = w2.astype(jnp.bfloat16).astype(jnp.float32)
    hi = jax.lax.Precision.HIGHEST
    ref_scales = []
    for K in ks:
        d2 = jnp.sum((pos_q[:, None, :] - pos[None, :, :]) ** 2, axis=-1)
        same = batch_q[:, None] == batch[None, :]
        d2 = jnp.where(same, d2, jnp.inf)
        _, neigh = jax.lax.top_k(-d2, K)
        feat = jnp.concatenate(
            [x[neigh], pos[neigh] - pos_q[:, None, :],
             jnp.ones((M, K, 1), jnp.float32)], axis=-1)
        feat_b = feat.astype(jnp.bfloat16).astype(jnp.float32)
        h = jnp.maximum(jnp.einsum('mkf,fh->mkh', feat_b, w1_aug_r, precision=hi), 0.0)
        hb = h.astype(jnp.bfloat16).astype(jnp.float32)
        h2 = jnp.maximum(jnp.einsum('mkh,hc->mkc', hb, w2_r, precision=hi) + b2[None], 0.0)
        ref_scales.append(jnp.max(h2, axis=1))
    ref_x = jnp.concatenate(ref_scales, axis=-1)

    assert out_x.shape == (M, len(ks) * C_out)
    assert out_pos.shape == (M, 3) and out_batch.shape == (M,)
    assert jnp.allclose(out_x, ref_x, atol=1e-2, rtol=1e-2), \
        float(jnp.max(jnp.abs(out_x - ref_x)))
    print("KERNEL_OK")
</pallas_src>

<mosaic_0001>
module attributes {stable_mosaic.version = 11 : i64} {
  func.func @_ms_conv_kernel(%arg0: i32, %arg1: memref<2x8x16x8xbf16, #tpu.memory_space<vmem>>, %arg2: memref<8x32xbf16, #tpu.memory_space<vmem>>, %arg3: memref<32x32xbf16, #tpu.memory_space<vmem>>, %arg4: memref<1x32xf32, #tpu.memory_space<vmem>>, %arg5: memref<16x64xf32, #tpu.memory_space<vmem>>) attributes {dimension_semantics = [#tpu.dimension_semantics<parallel>], iteration_bounds = array<i64: 1>, scalar_prefetch = 0 : i64, scratch_operands = 0 : i64, tpu.core_type = #tpu.core_type<tc>, window_params = [{transform_indices = @transform_0, window_bounds = array<i64: 2, 8, 16, 8>}, {pipeline_mode = #tpu.pipeline_mode<synchronous>, transform_indices = @transform_1, window_bounds = array<i64: 8, 32>}, {pipeline_mode = #tpu.pipeline_mode<synchronous>, transform_indices = @transform_2, window_bounds = array<i64: 32, 32>}, {pipeline_mode = #tpu.pipeline_mode<synchronous>, transform_indices = @transform_3, window_bounds = array<i64: 1, 32>}, {transform_indices = @transform_4, window_bounds = array<i64: 16, 64>}]} {
    %c0 = arith.constant 0 : index
    %c0_0 = arith.constant 0 : index
    %0 = vector.load %arg2[%c0, %c0_0] : memref<8x32xbf16, #tpu.memory_space<vmem>>, vector<8x32xbf16>
    %c0_1 = arith.constant 0 : index
    %c0_2 = arith.constant 0 : index
    %1 = vector.load %arg3[%c0_1, %c0_2] : memref<32x32xbf16, #tpu.memory_space<vmem>>, vector<32x32xbf16>
    %c0_3 = arith.constant 0 : index
    %c0_4 = arith.constant 0 : index
    %2 = vector.load %arg4[%c0_3, %c0_4] : memref<1x32xf32, #tpu.memory_space<vmem>>, vector<1x32xf32>
    %c0_5 = arith.constant 0 : index
    %c0_6 = arith.constant 0 : index
    %c0_7 = arith.constant 0 : index
    %c0_8 = arith.constant 0 : index
    %3 = vector.load %arg1[%c0_5, %c0_6, %c0_7, %c0_8] : memref<2x8x16x8xbf16, #tpu.memory_space<vmem>>, vector<1x8x16x8xbf16>
    %4 = vector.shape_cast %3 : vector<1x8x16x8xbf16> to vector<8x16x8xbf16>
    %5 = vector.shape_cast %4 : vector<8x16x8xbf16> to vector<128x8xbf16>
    %cst = arith.constant dense<0.000000e+00> : vector<128x32xf32>
    %6 = tpu.matmul %5, %0, %cst {dimension_numbers = #tpu.dot_dimension_numbers<[1], [0], [0], [1], [0, 0, 1, 1], [], []>} : vector<128x8xbf16>, vector<8x32xbf16>, vector<128x32xf32> -> vector<128x32xf32>
    %cst_9 = arith.constant 0.000000e+00 : f32
    %7 = vector.broadcast %cst_9 : f32 to vector<128x32xf32>
    %8 = arith.maximumf %6, %7 : vector<128x32xf32>
    %9 = arith.truncf %8 : vector<128x32xf32> to vector<128x32xbf16>
    %cst_10 = arith.constant dense<0.000000e+00> : vector<128x32xf32>
    %10 = tpu.matmul %9, %1, %cst_10 {dimension_numbers = #tpu.dot_dimension_numbers<[1], [0], [0], [1], [0, 0, 1, 1], [], []>} : vector<128x32xbf16>, vector<32x32xbf16>, vector<128x32xf32> -> vector<128x32xf32>
    %11 = vector.broadcast %2 : vector<1x32xf32> to vector<128x32xf32>
    %12 = arith.addf %10, %11 : vector<128x32xf32>
    %cst_11 = arith.constant 0.000000e+00 : f32
    %13 = vector.broadcast %cst_11 : f32 to vector<128x32xf32>
    %14 = arith.maximumf %12, %13 : vector<128x32xf32>
    %15 = vector.extract_strided_slice %14 {offsets = [0, 0], sizes = [16, 32], strides = [1, 1]} : vector<128x32xf32> to vector<16x32xf32>
    %16 = vector.extract_strided_slice %14 {offsets = [16, 0], sizes = [16, 32], strides = [1, 1]} : vector<128x32xf32> to vector<16x32xf32>
    %17 = arith.maximumf %15, %16 : vector<16x32xf32>
    %18 = vector.extract_strided_slice %14 {offsets = [32, 0], sizes = [16, 32], strides = [1, 1]} : vector<128x32xf32> to vector<16x32xf32>
    %19 = arith.maximumf %17, %18 : vector<16x32xf32>
    %20 = vector.extract_strided_slice %14 {offsets = [48, 0], sizes = [16, 32], strides = [1, 1]} : vector<128x32xf32> to vector<16x32xf32>
    %21 = arith.maximumf %19, %20 : vector<16x32xf32>
    %22 = vector.extract_strided_slice %14 {offsets = [64, 0], sizes = [16, 32], strides = [1, 1]} : vector<128x32xf32> to vector<16x32xf32>
    %23 = arith.maximumf %21, %22 : vector<16x32xf32>
    %24 = vector.extract_strided_slice %14 {offsets = [80, 0], sizes = [16, 32], strides = [1, 1]} : vector<128x32xf32> to vector<16x32xf32>
    %25 = arith.maximumf %23, %24 : vector<16x32xf32>
    %26 = vector.extract_strided_slice %14 {offsets = [96, 0], sizes = [16, 32], strides = [1, 1]} : vector<128x32xf32> to vector<16x32xf32>
    %27 = arith.maximumf %25, %26 : vector<16x32xf32>
    %28 = vector.extract_strided_slice %14 {offsets = [112, 0], sizes = [16, 32], strides = [1, 1]} : vector<128x32xf32> to vector<16x32xf32>
    %29 = arith.maximumf %27, %28 : vector<16x32xf32>
    %c1 = arith.constant 1 : index
    %c0_12 = arith.constant 0 : index
    %c0_13 = arith.constant 0 : index
    %c0_14 = arith.constant 0 : index
    %30 = vector.load %arg1[%c1, %c0_12, %c0_13, %c0_14] : memref<2x8x16x8xbf16, #tpu.memory_space<vmem>>, vector<1x8x16x8xbf16>
    %31 = vector.shape_cast %30 : vector<1x8x16x8xbf16> to vector<8x16x8xbf16>
    %32 = vector.shape_cast %31 : vector<8x16x8xbf16> to vector<128x8xbf16>
    %cst_15 = arith.constant dense<0.000000e+00> : vector<128x32xf32>
    %33 = tpu.matmul %32, %0, %cst_15 {dimension_numbers = #tpu.dot_dimension_numbers<[1], [0], [0], [1], [0, 0, 1, 1], [], []>} : vector<128x8xbf16>, vector<8x32xbf16>, vector<128x32xf32> -> vector<128x32xf32>
    %cst_16 = arith.constant 0.000000e+00 : f32
    %34 = vector.broadcast %cst_16 : f32 to vector<128x32xf32>
    %35 = arith.maximumf %33, %34 : vector<128x32xf32>
    %36 = arith.truncf %35 : vector<128x32xf32> to vector<128x32xbf16>
    %cst_17 = arith.constant dense<0.000000e+00> : vector<128x32xf32>
    %37 = tpu.matmul %36, %1, %cst_17 {dimension_numbers = #tpu.dot_dimension_numbers<[1], [0], [0], [1], [0, 0, 1, 1], [], []>} : vector<128x32xbf16>, vector<32x32xbf16>, vector<128x32xf32> -> vector<128x32xf32>
    %38 = vector.broadcast %2 : vector<1x32xf32> to vector<128x32xf32>
    %39 = arith.addf %37, %38 : vector<128x32xf32>
    %cst_18 = arith.constant 0.000000e+00 : f32
    %40 = vector.broadcast %cst_18 : f32 to vector<128x32xf32>
    %41 = arith.maximumf %39, %40 : vector<128x32xf32>
    %42 = vector.extract_strided_slice %41 {offsets = [0, 0], sizes = [16, 32], strides = [1, 1]} : vector<128x32xf32> to vector<16x32xf32>
    %43 = vector.extract_strided_slice %41 {offsets = [16, 0], sizes = [16, 32], strides = [1, 1]} : vector<128x32xf32> to vector<16x32xf32>
    %44 = arith.maximumf %42, %43 : vector<16x32xf32>
    %45 = vector.extract_strided_slice %41 {offsets = [32, 0], sizes = [16, 32], strides = [1, 1]} : vector<128x32xf32> to vector<16x32xf32>
    %46 = arith.maximumf %44, %45 : vector<16x32xf32>
    %47 = vector.extract_strided_slice %41 {offsets = [48, 0], sizes = [16, 32], strides = [1, 1]} : vector<128x32xf32> to vector<16x32xf32>
    %48 = arith.maximumf %46, %47 : vector<16x32xf32>
    %49 = vector.extract_strided_slice %41 {offsets = [64, 0], sizes = [16, 32], strides = [1, 1]} : vector<128x32xf32> to vector<16x32xf32>
    %50 = arith.maximumf %48, %49 : vector<16x32xf32>
    %51 = vector.extract_strided_slice %41 {offsets = [80, 0], sizes = [16, 32], strides = [1, 1]} : vector<128x32xf32> to vector<16x32xf32>
    %52 = arith.maximumf %50, %51 : vector<16x32xf32>
    %53 = vector.extract_strided_slice %41 {offsets = [96, 0], sizes = [16, 32], strides = [1, 1]} : vector<128x32xf32> to vector<16x32xf32>
    %54 = arith.maximumf %52, %53 : vector<16x32xf32>
    %55 = vector.extract_strided_slice %41 {offsets = [112, 0], sizes = [16, 32], strides = [1, 1]} : vector<128x32xf32> to vector<16x32xf32>
    %56 = arith.maximumf %54, %55 : vector<16x32xf32>
    %57 = tpu.concatenate %29, %56 in 1 : vector<16x32xf32>, vector<16x32xf32> -> vector<16x64xf32>
    %c0_19 = arith.constant 0 : index
    %c0_20 = arith.constant 0 : index
    %58 = vector.load %arg5[%c0_19, %c0_20] : memref<16x64xf32, #tpu.memory_space<vmem>>, vector<16x64xf32>
    tpu.vector_store %arg5[%c0_19, %c0_20], %57 {strides = array<i32>} : memref<16x64xf32, #tpu.memory_space<vmem>>, vector<16x64xf32>,
    return
  }
  func.func @transform_0(%arg0: i32) -> (i32, i32, i32, i32) {
    %c0_i32 = arith.constant 0 : i32
    %c0_i32_0 = arith.constant 0 : i32
    %c0_i32_1 = arith.constant 0 : i32
    %c0_i32_2 = arith.constant 0 : i32
    return %c0_i32, %c0_i32_0, %arg0, %c0_i32_1 : i32, i32, i32, i32
  }
  func.func @transform_1(%arg0: i32) -> (i32, i32) {
    %c0_i32 = arith.constant 0 : i32
    %c0_i32_0 = arith.constant 0 : i32
    %c0_i32_1 = arith.constant 0 : i32
    return %c0_i32, %c0_i32_0 : i32, i32
  }
  func.func @transform_2(%arg0: i32) -> (i32, i32) {
    %c0_i32 = arith.constant 0 : i32
    %c0_i32_0 = arith.constant 0 : i32
    %c0_i32_1 = arith.constant 0 : i32
    return %c0_i32, %c0_i32_0 : i32, i32
  }
  func.func @transform_3(%arg0: i32) -> (i32, i32) {
    %c0_i32 = arith.constant 0 : i32
    %c0_i32_0 = arith.constant 0 : i32
    %c0_i32_1 = arith.constant 0 : i32
    return %c0_i32, %c0_i32_0 : i32, i32
  }
  func.func @transform_4(%arg0: i32) -> (i32, i32) {
    %c0_i32 = arith.constant 0 : i32
    %c0_i32_0 = arith.constant 0 : i32
    return %arg0, %c0_i32 : i32, i32
  }
}

</mosaic_0001>

<llo_original>
// kernel: tpu_custom_call.1
$region0: #{tpu_custom_call.1}
  #allocation0 [shape = 'u32[]', space=smem, size = 0x4, offset = 0x4, fixed_abs, tag = 'smem constant byte address 0x4 - core index']
  #allocation1 [shape = 'u32[144,128]{1,0:T(1,128)}', space=vmem, size = 0x12000, scoped, tag = 'internal scratch']
  %s0 = inlined_call_operand.vmem [shape: bf16[2,8,16,8], index: 0, kind: input, shape index: {}]
  %s1 = inlined_call_operand.vmem [shape: bf16[8,32], index: 1, kind: input, shape index: {}]
  %s2 = inlined_call_operand.vmem [shape: bf16[32,32], index: 2, kind: input, shape index: {}]
  %s3 = inlined_call_operand.vmem [shape: f32[1,32], index: 3, kind: input, shape index: {}]
  %s4 = inlined_call_operand.hbm [shape: f32[16,64], index: 4, kind: output, shape index: {}]
  %s5 = sld [smem:[#allocation0]]
  $region26: #{tpu_custom_call.1} parent=0
    _
  %s7 = ssub.s32 1, %s5
  %s8 = scalar_select 0, %s7, %s5
  $region1: #{tpu_custom_call.1} parent=0
    #allocation2 [shape = 'u8[8192]{0}', space=vmem, size = 0x2000, scoped, tag = 'output window, operand 0, single buffered']
    #allocation3 [shape = 's32[1]{0}', space=sflag, size = 0x4, scoped, tag = 'scoped memory for tpu_custom_call.1']
    %9 = vsyncpa [#allocation3], 0
    // Predicated region
    $region2: #{tpu_custom_call.1} parent=1 // pred_check
      _
    $region3: #{tpu_custom_call.1} parent=1 // pred_check_branch
      %11 = sbr.rel (0) target = $region5
    $region4: #{tpu_custom_call.1} parent=1 // pred_region
      _
    $region5: #{tpu_custom_call.1} parent=1 // pred_fallthru
      _
    // Predicated region
    $region6: #{tpu_custom_call.1} parent=1 // pred_check
      _
    $region7: #{tpu_custom_call.1} parent=1 // pred_check_branch
      %13 = sbr.rel (0) target = $region9
    $region8: #{tpu_custom_call.1} parent=1 // pred_region
      _
    $region9: #{tpu_custom_call.1} parent=1 // pred_fallthru
      _
    // Predicated region
    $region10: #{tpu_custom_call.1} parent=1 // pred_check
      _
    $region11: #{tpu_custom_call.1} parent=1 // pred_check_branch
      %15 = sbr.rel (0) target = $region13
    $region12: #{tpu_custom_call.1} parent=1 // pred_region
      _
    $region13: #{tpu_custom_call.1} parent=1 // pred_fallthru
      _
    // Predicated region
    $region14: #{tpu_custom_call.1} parent=1 // pred_check
      _
    $region15: #{tpu_custom_call.1} parent=1 // pred_check_branch
      %17 = sbr.rel (0) target = $region17
    $region16: #{tpu_custom_call.1} parent=1 // pred_region
      _
    $region17: #{tpu_custom_call.1} parent=1 // pred_fallthru
      _
    %v19 = vld [vmem:[%s1] sm:$0xf]
    %v20 = vld [vmem:[%s2] sm:$0xf]
    %v21 = vld [vmem:[%s2 + $0x4] sm:$0xf]
    %v22 = vld [vmem:[%s2 + $0x8] sm:$0xf]
    %v23 = vld [vmem:[%s2 + $0xc] sm:$0xf]
    %v24 = vld [vmem:[%s3] sm:$0x1]
    %v25 = vld [vmem:[%s0] sm:$0xf]
    %v26 = vld [vmem:[%s0 + $0x4] sm:$0xf]
    %v27 = vld [vmem:[%s0 + $0x8] sm:$0xf]
    %v28 = vld [vmem:[%s0 + $0xc] sm:$0xf]
    %v29 = vld [vmem:[%s0 + $0x10] sm:$0xf]
    %v30 = vld [vmem:[%s0 + $0x14] sm:$0xf]
    %v31 = vld [vmem:[%s0 + $0x18] sm:$0xf]
    %v32 = vld [vmem:[%s0 + $0x1c] sm:$0xf]
    %v33 = vld [vmem:[%s0 + $0x20] sm:$0xf]
    %v34 = vld [vmem:[%s0 + $0x24] sm:$0xf]
    %v35 = vld [vmem:[%s0 + $0x28] sm:$0xf]
    %v36 = vld [vmem:[%s0 + $0x2c] sm:$0xf]
    %v37 = vld [vmem:[%s0 + $0x30] sm:$0xf]
    %v38 = vld [vmem:[%s0 + $0x34] sm:$0xf]
    %v39 = vld [vmem:[%s0 + $0x38] sm:$0xf]
    %v40 = vld [vmem:[%s0 + $0x3c] sm:$0xf]
    %v57 = vunpack.c.l.b16 %v25
    %v58 = vunpack.c.l.b16 %v26
    %v59 = vunpack.c.l.b16 %v27
    %v60 = vunpack.c.l.b16 %v28
    %v61 = vunpack.c.l.b16 %v29
    %v62 = vunpack.c.l.b16 %v30
    %v63 = vunpack.c.l.b16 %v31
    %v64 = vunpack.c.l.b16 %v32
    %v65 = vunpack.c.l.b16 %v33
    %v66 = vunpack.c.l.b16 %v34
    %v67 = vunpack.c.l.b16 %v35
    %v68 = vunpack.c.l.b16 %v36
    %v69 = vunpack.c.l.b16 %v37
    %v70 = vunpack.c.l.b16 %v38
    %v71 = vunpack.c.l.b16 %v39
    %v72 = vunpack.c.l.b16 %v40
    %v73 = vpack.c.b16 %v58, %v57
    %v74 = vpack.c.b16 %v60, %v59
    %v75 = vpack.c.b16 %v62, %v61
    %v76 = vpack.c.b16 %v64, %v63
    %v77 = vpack.c.b16 %v66, %v65
    %v78 = vpack.c.b16 %v68, %v67
    %v79 = vpack.c.b16 %v70, %v69
    %v80 = vpack.c.b16 %v72, %v71
    %vm81 = vcmask 64512
    %v83 = vsel %vm81, %v73, 0
    %v86 = vsel %vm81, %v74, 0
    %v89 = vsel %vm81, %v75, 0
    %v92 = vsel %vm81, %v76, 0
    %v95 = vsel %vm81, %v77, 0
    %v98 = vsel %vm81, %v78, 0
    %v101 = vsel %vm81, %v79, 0
    %v104 = vsel %vm81, %v80, 0
    %vm106 = vcmask 1043456
    %v108 = vsel %vm106, %v19, 0
    %110 = vmatprep.subr.bf16.mxu0 0
    %111 = vmatpush1.bf16.msra.mxu0 0
    %112 = vmatprep.subr.bf16.mxu0 0
    %113 = vmatpush1.bf16.msra.mxu0 0
    %114 = vmatprep.subr.bf16.mxu0 0
    %115 = vmatpush1.bf16.msra.mxu0 0
    %116 = vmatprep.subr.bf16.mxu0 0
    %117 = vmatpush1.bf16.msra.mxu0 0
    %118 = vmatprep.subr.bf16.mxu0 0
    %119 = vmatpush1.bf16.msra.mxu0 0
    %120 = vmatprep.subr.bf16.mxu0 0
    %121 = vmatpush1.bf16.msra.mxu0 0
    %122 = vmatprep.subr.bf16.mxu0 0
    %123 = vmatpush1.bf16.msra.mxu0 0
    %124 = vmatprep.subr.bf16.mxu0 0
    %125 = vmatpush1.bf16.msra.mxu0 %v108
    %126 = vmatprep.subr.bf16.mxu0 0
    %127 = vmatpush2.bf16.msra.mxu0 0
    %128 = vmatprep.subr.bf16.mxu0 0
    %129 = vmatpush2.bf16.msra.mxu0 0
    %130 = vmatprep.subr.bf16.mxu0 0
    %131 = vmatpush2.bf16.msra.mxu0 0
    %132 = vmatprep.subr.bf16.mxu0 0
    %133 = vmatpush2.bf16.msra.mxu0 0
    %134 = vmatprep.subr.bf16.mxu0 0
    %135 = vmatpush2.bf16.msra.mxu0 0
    %136 = vmatprep.subr.bf16.mxu0 0
    %137 = vmatpush2.bf16.msra.mxu0 0
    %138 = vmatprep.subr.bf16.mxu0 0
    %139 = vmatpush2.bf16.msra.mxu0 0
    %140 = vmatprep.subr.bf16.mxu0 0
    %141 = vmatpush2.bf16.msra.mxu0 0
    %142 = vmatprep.mubr.bf16.mxu0 0
    %143 = vmatmul.mubr.bf16.gmra.mxu0 %v83
    %v144 = vpop.f32.mrf.mxu0
    %v145 = vadd.f32 0.0, %v144
    %v146 = vpop.f32.mrf.mxu0
    %v147 = vpop.f32.mrf.mxu0
    %v148 = vadd.f32 0.0, %v147
    %v149 = vpop.f32.mrf.mxu0
    %150 = vmatprep.mubr.bf16.mxu0 0
    %151 = vmatmul.mubr.bf16.gmra.mxu0 %v86
    %v152 = vpop.f32.mrf.mxu0
    %v153 = vadd.f32 0.0, %v152
    %v154 = vpop.f32.mrf.mxu0
    %v155 = vpop.f32.mrf.mxu0
    %v156 = vadd.f32 0.0, %v155
    %v157 = vpop.f32.mrf.mxu0
    %158 = vmatprep.mubr.bf16.mxu0 0
    %159 = vmatmul.mubr.bf16.gmra.mxu0 %v89
    %v160 = vpop.f32.mrf.mxu0
    %v161 = vadd.f32 0.0, %v160
    %v162 = vpop.f32.mrf.mxu0
    %v163 = vpop.f32.mrf.mxu0
    %v164 = vadd.f32 0.0, %v163
    %v165 = vpop.f32.mrf.mxu0
    %166 = vmatprep.mubr.bf16.mxu0 0
    %167 = vmatmul.mubr.bf16.gmra.mxu0 %v92
    %v168 = vpop.f32.mrf.mxu0
    %v169 = vadd.f32 0.0, %v168
    %v170 = vpop.f32.mrf.mxu0
    %v171 = vpop.f32.mrf.mxu0
    %v172 = vadd.f32 0.0, %v171
    %v173 = vpop.f32.mrf.mxu0
    %174 = vmatprep.mubr.bf16.mxu0 0
    %175 = vmatmul.mubr.bf16.gmra.mxu0 %v95
    %v176 = vpop.f32.mrf.mxu0
    %v177 = vadd.f32 0.0, %v176
    %v178 = vpop.f32.mrf.mxu0
    %v179 = vpop.f32.mrf.mxu0
    %v180 = vadd.f32 0.0, %v179
    %v181 = vpop.f32.mrf.mxu0
    %182 = vmatprep.mubr.bf16.mxu0 0
    %183 = vmatmul.mubr.bf16.gmra.mxu0 %v98
    %v184 = vpop.f32.mrf.mxu0
    %v185 = vadd.f32 0.0, %v184
    %v186 = vpop.f32.mrf.mxu0
    %v187 = vpop.f32.mrf.mxu0
    %v188 = vadd.f32 0.0, %v187
    %v189 = vpop.f32.mrf.mxu0
    %190 = vmatprep.mubr.bf16.mxu0 0
    %191 = vmatmul.mubr.bf16.gmra.mxu0 %v101
    %v192 = vpop.f32.mrf.mxu0
    %v193 = vadd.f32 0.0, %v192
    %v194 = vpop.f32.mrf.mxu0
    %v195 = vpop.f32.mrf.mxu0
    %v196 = vadd.f32 0.0, %v195
    %v197 = vpop.f32.mrf.mxu0
    %198 = vmatprep.mubr.bf16.mxu0 0
    %199 = vmatmul.mubr.bf16.gmra.mxu0 %v104
    %v200 = vpop.f32.mrf.mxu0
    %v201 = vadd.f32 0.0, %v200
    %v202 = vpop.f32.mrf.mxu0
    %v203 = vpop.f32.mrf.mxu0
    %v204 = vadd.f32 0.0, %v203
    %v205 = vpop.f32.mrf.mxu0
    %206 = vdwg.mxu0
    %v207 = vmax.f32 %v145, 0.0
    %v208 = vmax.f32 %v148, 0.0
    %v209 = vmax.f32 %v153, 0.0
    %v210 = vmax.f32 %v156, 0.0
    %v211 = vmax.f32 %v161, 0.0
    %v212 = vmax.f32 %v164, 0.0
    %v213 = vmax.f32 %v169, 0.0
    %v214 = vmax.f32 %v172, 0.0
    %v215 = vmax.f32 %v177, 0.0
    %v216 = vmax.f32 %v180, 0.0
    %v217 = vmax.f32 %v185, 0.0
    %v218 = vmax.f32 %v188, 0.0
    %v219 = vmax.f32 %v193, 0.0
    %v220 = vmax.f32 %v196, 0.0
    %v221 = vmax.f32 %v201, 0.0
    %v222 = vmax.f32 %v204, 0.0
    %v223 = vpack.c.bf16 %v208, %v207
    %v224 = vpack.c.bf16 %v210, %v209
    %v225 = vpack.c.bf16 %v212, %v211
    %v226 = vpack.c.bf16 %v214, %v213
    %v227 = vpack.c.bf16 %v216, %v215
    %v228 = vpack.c.bf16 %v218, %v217
    %v229 = vpack.c.bf16 %v220, %v219
    %v230 = vpack.c.bf16 %v222, %v221
    %v232 = vlaneseq
    %v233 = vshrl.u32 %v232, 7
    %v234 = vsub.s32 0, %v233
    %v235 = vrot.slane %v24, %v234
    %v241 = vunpack.c.l.b16 %v20
    %v242 = vunpack.c.l.b16 %v21
    %v243 = vunpack.c.l.b16 %v22
    %v244 = vunpack.c.l.b16 %v23
    %v245 = vpack.c.b16 %v242, %v241
    %v246 = vpack.c.b16 %v244, %v243
    %vm249 = vcmask 261120
    %v251 = vsel %vm249, %v223, 0
    %v254 = vsel %vm249, %v224, 0
    %v257 = vsel %vm249, %v225, 0
    %v260 = vsel %vm249, %v226, 0
    %v263 = vsel %vm249, %v227, 0
    %v266 = vsel %vm249, %v228, 0
    %v269 = vsel %vm249, %v229, 0
    %v272 = vsel %vm249, %v230, 0
    %274 = vmatprep.subr.bf16.mxu0 0
    %275 = vmatpush1.bf16.msra.mxu0 0
    %276 = vmatprep.subr.bf16.mxu0 0
    %277 = vmatpush1.bf16.msra.mxu0 0
    %278 = vmatprep.subr.bf16.mxu0 0
    %279 = vmatpush1.bf16.msra.mxu0 0
    %280 = vmatprep.subr.bf16.mxu0 0
    %281 = vmatpush1.bf16.msra.mxu0 0
    %282 = vmatprep.subr.bf16.mxu0 0
    %283 = vmatpush1.bf16.msra.mxu0 0
    %284 = vmatprep.subr.bf16.mxu0 0
    %285 = vmatpush1.bf16.msra.mxu0 0
    %286 = vmatprep.subr.bf16.mxu0 0
    %287 = vmatpush1.bf16.msra.mxu0 %v246
    %288 = vmatprep.subr.bf16.mxu0 0
    %289 = vmatpush1.bf16.msra.mxu0 %v245
    %290 = vmatprep.subr.bf16.mxu0 0
    %291 = vmatpush2.bf16.msra.mxu0 0
    %292 = vmatprep.subr.bf16.mxu0 0
    %293 = vmatpush2.bf16.msra.mxu0 0
    %294 = vmatprep.subr.bf16.mxu0 0
    %295 = vmatpush2.bf16.msra.mxu0 0
    %296 = vmatprep.subr.bf16.mxu0 0
    %297 = vmatpush2.bf16.msra.mxu0 0
    %298 = vmatprep.subr.bf16.mxu0 0
    %299 = vmatpush2.bf16.msra.mxu0 0
    %300 = vmatprep.subr.bf16.mxu0 0
    %301 = vmatpush2.bf16.msra.mxu0 0
    %302 = vmatprep.subr.bf16.mxu0 0
    %303 = vmatpush2.bf16.msra.mxu0 0
    %304 = vmatprep.subr.bf16.mxu0 0
    %305 = vmatpush2.bf16.msra.mxu0 0
    %306 = vmatprep.mubr.bf16.mxu0 0
    %307 = vmatmul.mubr.bf16.gmra.mxu0 %v251
    %v308 = vpop.f32.mrf.mxu0
    %v309 = vadd.f32 %v235, %v308
    %v310 = vpop.f32.mrf.mxu0
    %v311 = vpop.f32.mrf.mxu0
    %v312 = vadd.f32 %v235, %v311
    %v313 = vpop.f32.mrf.mxu0
    %314 = vmatprep.mubr.bf16.mxu0 0
    %315 = vmatmul.mubr.bf16.gmra.mxu0 %v254
    %v316 = vpop.f32.mrf.mxu0
    %v317 = vadd.f32 %v235, %v316
    %v318 = vpop.f32.mrf.mxu0
    %v319 = vpop.f32.mrf.mxu0
    %v320 = vadd.f32 %v235, %v319
    %v321 = vpop.f32.mrf.mxu0
    %322 = vmatprep.mubr.bf16.mxu0 0
    %323 = vmatmul.mubr.bf16.gmra.mxu0 %v257
    %v324 = vpop.f32.mrf.mxu0
    %v325 = vadd.f32 %v235, %v324
    %v326 = vpop.f32.mrf.mxu0
    %v327 = vpop.f32.mrf.mxu0
    %v328 = vadd.f32 %v235, %v327
    %v329 = vpop.f32.mrf.mxu0
    %330 = vmatprep.mubr.bf16.mxu0 0
    %331 = vmatmul.mubr.bf16.gmra.mxu0 %v260
    %v332 = vpop.f32.mrf.mxu0
    %v333 = vadd.f32 %v235, %v332
    %v334 = vpop.f32.mrf.mxu0
    %v335 = vpop.f32.mrf.mxu0
    %v336 = vadd.f32 %v235, %v335
    %v337 = vpop.f32.mrf.mxu0
    %338 = vmatprep.mubr.bf16.mxu0 0
    %339 = vmatmul.mubr.bf16.gmra.mxu0 %v263
    %v340 = vpop.f32.mrf.mxu0
    %v341 = vadd.f32 %v235, %v340
    %v342 = vpop.f32.mrf.mxu0
    %v343 = vpop.f32.mrf.mxu0
    %v344 = vadd.f32 %v235, %v343
    %v345 = vpop.f32.mrf.mxu0
    %346 = vmatprep.mubr.bf16.mxu0 0
    %347 = vmatmul.mubr.bf16.gmra.mxu0 %v266
    %v348 = vpop.f32.mrf.mxu0
    %v349 = vadd.f32 %v235, %v348
    %v350 = vpop.f32.mrf.mxu0
    %v351 = vpop.f32.mrf.mxu0
    %v352 = vadd.f32 %v235, %v351
    %v353 = vpop.f32.mrf.mxu0
    %354 = vmatprep.mubr.bf16.mxu0 0
    %355 = vmatmul.mubr.bf16.gmra.mxu0 %v269
    %v356 = vpop.f32.mrf.mxu0
    %v357 = vadd.f32 %v235, %v356
    %v358 = vpop.f32.mrf.mxu0
    %v359 = vpop.f32.mrf.mxu0
    %v360 = vadd.f32 %v235, %v359
    %v361 = vpop.f32.mrf.mxu0
    %362 = vmatprep.mubr.bf16.mxu0 0
    %363 = vmatmul.mubr.bf16.gmra.mxu0 %v272
    %v364 = vpop.f32.mrf.mxu0
    %v365 = vadd.f32 %v235, %v364
    %v366 = vpop.f32.mrf.mxu0
    %v367 = vpop.f32.mrf.mxu0
    %v368 = vadd.f32 %v235, %v367
    %v369 = vpop.f32.mrf.mxu0
    %370 = vdwg.mxu0
    %v371 = vmax.f32 %v309, 0.0
    %v372 = vmax.f32 %v312, 0.0
    %v373 = vmax.f32 %v317, 0.0
    %v374 = vmax.f32 %v320, 0.0
    %v375 = vmax.f32 %v325, 0.0
    %v376 = vmax.f32 %v328, 0.0
    %v377 = vmax.f32 %v333, 0.0
    %v378 = vmax.f32 %v336, 0.0
    %v379 = vmax.f32 %v341, 0.0
    %v380 = vmax.f32 %v344, 0.0
    %v381 = vmax.f32 %v349, 0.0
    %v382 = vmax.f32 %v352, 0.0
    %v383 = vmax.f32 %v357, 0.0
    %v384 = vmax.f32 %v360, 0.0
    %v385 = vmax.f32 %v365, 0.0
    %v386 = vmax.f32 %v368, 0.0
    %v387 = vmax.f32 %v371, %v373
    %v388 = vmax.f32 %v372, %v374
    %v389 = vmax.f32 %v387, %v375
    %v390 = vmax.f32 %v388, %v376
    %v391 = vmax.f32 %v389, %v377
    %v392 = vmax.f32 %v390, %v378
    %v393 = vmax.f32 %v391, %v379
    %v394 = vmax.f32 %v392, %v380
    %v395 = vmax.f32 %v393, %v381
    %v396 = vmax.f32 %v394, %v382
    %v397 = vmax.f32 %v395, %v383
    %v398 = vmax.f32 %v396, %v384
    %v399 = vmax.f32 %v397, %v385
    %v400 = vmax.f32 %v398, %v386
    %s401 = scalar_lea.vmem %s0, 64
    %v402 = vld [vmem:[%s401] sm:$0xf]
    %v403 = vld [vmem:[%s401 + $0x4] sm:$0xf]
    %v404 = vld [vmem:[%s401 + $0x8] sm:$0xf]
    %v405 = vld [vmem:[%s401 + $0xc] sm:$0xf]
    %v406 = vld [vmem:[%s401 + $0x10] sm:$0xf]
    %v407 = vld [vmem:[%s401 + $0x14] sm:$0xf]
    %v408 = vld [vmem:[%s401 + $0x18] sm:$0xf]
    %v409 = vld [vmem:[%s401 + $0x1c] sm:$0xf]
    %v410 = vld [vmem:[%s401 + $0x20] sm:$0xf]
    %v411 = vld [vmem:[%s401 + $0x24] sm:$0xf]
    %v412 = vld [vmem:[%s401 + $0x28] sm:$0xf]
    %v413 = vld [vmem:[%s401 + $0x2c] sm:$0xf]
    %v414 = vld [vmem:[%s401 + $0x30] sm:$0xf]
    %v415 = vld [vmem:[%s401 + $0x34] sm:$0xf]
    %v416 = vld [vmem:[%s401 + $0x38] sm:$0xf]
    %v417 = vld [vmem:[%s401 + $0x3c] sm:$0xf]
    %v434 = vunpack.c.l.b16 %v402
    %v435 = vunpack.c.l.b16 %v403
    %v436 = vunpack.c.l.b16 %v404
    %v437 = vunpack.c.l.b16 %v405
    %v438 = vunpack.c.l.b16 %v406
    %v439 = vunpack.c.l.b16 %v407
    %v440 = vunpack.c.l.b16 %v408
    %v441 = vunpack.c.l.b16 %v409
    %v442 = vunpack.c.l.b16 %v410
    %v443 = vunpack.c.l.b16 %v411
    %v444 = vunpack.c.l.b16 %v412
    %v445 = vunpack.c.l.b16 %v413
    %v446 = vunpack.c.l.b16 %v414
    %v447 = vunpack.c.l.b16 %v415
    %v448 = vunpack.c.l.b16 %v416
    %v449 = vunpack.c.l.b16 %v417
    %v450 = vpack.c.b16 %v435, %v434
    %v451 = vpack.c.b16 %v437, %v436
    %v452 = vpack.c.b16 %v439, %v438
    %v453 = vpack.c.b16 %v441, %v440
    %v454 = vpack.c.b16 %v443, %v442
    %v455 = vpack.c.b16 %v445, %v444
    %v456 = vpack.c.b16 %v447, %v446
    %v457 = vpack.c.b16 %v449, %v448
    %v459 = vsel %vm81, %v450, 0
    %v462 = vsel %vm81, %v451, 0
    %v465 = vsel %vm81, %v452, 0
    %v468 = vsel %vm81, %v453, 0
    %v471 = vsel %vm81, %v454, 0
    %v474 = vsel %vm81, %v455, 0
    %v477 = vsel %vm81, %v456, 0
    %v480 = vsel %vm81, %v457, 0
    %482 = vmatprep.subr.bf16.mxu0 0
    %483 = vmatpush1.bf16.msra.mxu0 0
    %484 = vmatprep.subr.bf16.mxu0 0
    %485 = vmatpush1.bf16.msra.mxu0 0
    %486 = vmatprep.subr.bf16.mxu0 0
    %487 = vmatpush1.bf16.msra.mxu0 0
    %488 = vmatprep.subr.bf16.mxu0 0
    %489 = vmatpush1.bf16.msra.mxu0 0
    %490 = vmatprep.subr.bf16.mxu0 0
    %491 = vmatpush1.bf16.msra.mxu0 0
    %492 = vmatprep.subr.bf16.mxu0 0
    %493 = vmatpush1.bf16.msra.mxu0 0
    %494 = vmatprep.subr.bf16.mxu0 0
    %495 = vmatpush1.bf16.msra.mxu0 0
    %496 = vmatprep.subr.bf16.mxu0 0
    %497 = vmatpush1.bf16.msra.mxu0 %v108
    %498 = vmatprep.subr.bf16.mxu0 0
    %499 = vmatpush2.bf16.msra.mxu0 0
    %500 = vmatprep.subr.bf16.mxu0 0
    %501 = vmatpush2.bf16.msra.mxu0 0
    %502 = vmatprep.subr.bf16.mxu0 0
    %503 = vmatpush2.bf16.msra.mxu0 0
    %504 = vmatprep.subr.bf16.mxu0 0
    %505 = vmatpush2.bf16.msra.mxu0 0
    %506 = vmatprep.subr.bf16.mxu0 0
    %507 = vmatpush2.bf16.msra.mxu0 0
    %508 = vmatprep.subr.bf16.mxu0 0
    %509 = vmatpush2.bf16.msra.mxu0 0
    %510 = vmatprep.subr.bf16.mxu0 0
    %511 = vmatpush2.bf16.msra.mxu0 0
    %512 = vmatprep.subr.bf16.mxu0 0
    %513 = vmatpush2.bf16.msra.mxu0 0
    %514 = vmatprep.mubr.bf16.mxu0 0
    %515 = vmatmul.mubr.bf16.gmra.mxu0 %v459
    %v516 = vpop.f32.mrf.mxu0
    %v517 = vadd.f32 0.0, %v516
    %v518 = vpop.f32.mrf.mxu0
    %v519 = vpop.f32.mrf.mxu0
    %v520 = vadd.f32 0.0, %v519
    %v521 = vpop.f32.mrf.mxu0
    %522 = vmatprep.mubr.bf16.mxu0 0
    %523 = vmatmul.mubr.bf16.gmra.mxu0 %v462
    %v524 = vpop.f32.mrf.mxu0
    %v525 = vadd.f32 0.0, %v524
    %v526 = vpop.f32.mrf.mxu0
    %v527 = vpop.f32.mrf.mxu0
    %v528 = vadd.f32 0.0, %v527
    %v529 = vpop.f32.mrf.mxu0
    %530 = vmatprep.mubr.bf16.mxu0 0
    %531 = vmatmul.mubr.bf16.gmra.mxu0 %v465
    %v532 = vpop.f32.mrf.mxu0
    %v533 = vadd.f32 0.0, %v532
    %v534 = vpop.f32.mrf.mxu0
    %v535 = vpop.f32.mrf.mxu0
    %v536 = vadd.f32 0.0, %v535
    %v537 = vpop.f32.mrf.mxu0
    %538 = vmatprep.mubr.bf16.mxu0 0
    %539 = vmatmul.mubr.bf16.gmra.mxu0 %v468
    %v540 = vpop.f32.mrf.mxu0
    %v541 = vadd.f32 0.0, %v540
    %v542 = vpop.f32.mrf.mxu0
    %v543 = vpop.f32.mrf.mxu0
    %v544 = vadd.f32 0.0, %v543
    %v545 = vpop.f32.mrf.mxu0
    %546 = vmatprep.mubr.bf16.mxu0 0
    %547 = vmatmul.mubr.bf16.gmra.mxu0 %v471
    %v548 = vpop.f32.mrf.mxu0
    %v549 = vadd.f32 0.0, %v548
    %v550 = vpop.f32.mrf.mxu0
    %v551 = vpop.f32.mrf.mxu0
    %v552 = vadd.f32 0.0, %v551
    %v553 = vpop.f32.mrf.mxu0
    %554 = vmatprep.mubr.bf16.mxu0 0
    %555 = vmatmul.mubr.bf16.gmra.mxu0 %v474
    %v556 = vpop.f32.mrf.mxu0
    %v557 = vadd.f32 0.0, %v556
    %v558 = vpop.f32.mrf.mxu0
    %v559 = vpop.f32.mrf.mxu0
    %v560 = vadd.f32 0.0, %v559
    %v561 = vpop.f32.mrf.mxu0
    %562 = vmatprep.mubr.bf16.mxu0 0
    %563 = vmatmul.mubr.bf16.gmra.mxu0 %v477
    %v564 = vpop.f32.mrf.mxu0
    %v565 = vadd.f32 0.0, %v564
    %v566 = vpop.f32.mrf.mxu0
    %v567 = vpop.f32.mrf.mxu0
    %v568 = vadd.f32 0.0, %v567
    %v569 = vpop.f32.mrf.mxu0
    %570 = vmatprep.mubr.bf16.mxu0 0
    %571 = vmatmul.mubr.bf16.gmra.mxu0 %v480
    %v572 = vpop.f32.mrf.mxu0
    %v573 = vadd.f32 0.0, %v572
    %v574 = vpop.f32.mrf.mxu0
    %v575 = vpop.f32.mrf.mxu0
    %v576 = vadd.f32 0.0, %v575
    %v577 = vpop.f32.mrf.mxu0
    %578 = vdwg.mxu0
    %v579 = vmax.f32 %v517, 0.0
    %v580 = vmax.f32 %v520, 0.0
    %v581 = vmax.f32 %v525, 0.0
    %v582 = vmax.f32 %v528, 0.0
    %v583 = vmax.f32 %v533, 0.0
    %v584 = vmax.f32 %v536, 0.0
    %v585 = vmax.f32 %v541, 0.0
    %v586 = vmax.f32 %v544, 0.0
    %v587 = vmax.f32 %v549, 0.0
    %v588 = vmax.f32 %v552, 0.0
    %v589 = vmax.f32 %v557, 0.0
    %v590 = vmax.f32 %v560, 0.0
    %v591 = vmax.f32 %v565, 0.0
    %v592 = vmax.f32 %v568, 0.0
    %v593 = vmax.f32 %v573, 0.0
    %v594 = vmax.f32 %v576, 0.0
    %v595 = vpack.c.bf16 %v580, %v579
    %v596 = vpack.c.bf16 %v582, %v581
    %v597 = vpack.c.bf16 %v584, %v583
    %v598 = vpack.c.bf16 %v586, %v585
    %v599 = vpack.c.bf16 %v588, %v587
    %v600 = vpack.c.bf16 %v590, %v589
    %v601 = vpack.c.bf16 %v592, %v591
    %v602 = vpack.c.bf16 %v594, %v593
    %v604 = vsel %vm249, %v595, 0
    %v607 = vsel %vm249, %v596, 0
    %v610 = vsel %vm249, %v597, 0
    %v613 = vsel %vm249, %v598, 0
    %v616 = vsel %vm249, %v599, 0
    %v619 = vsel %vm249, %v600, 0
    %v622 = vsel %vm249, %v601, 0
    %v625 = vsel %vm249, %v602, 0
    %627 = vmatprep.subr.bf16.mxu0 0
    %628 = vmatpush1.bf16.msra.mxu0 0
    %629 = vmatprep.subr.bf16.mxu0 0
    %630 = vmatpush1.bf16.msra.mxu0 0
    %631 = vmatprep.subr.bf16.mxu0 0
    %632 = vmatpush1.bf16.msra.mxu0 0
    %633 = vmatprep.subr.bf16.mxu0 0
    %634 = vmatpush1.bf16.msra.mxu0 0
    %635 = vmatprep.subr.bf16.mxu0 0
    %636 = vmatpush1.bf16.msra.mxu0 0
    %637 = vmatprep.subr.bf16.mxu0 0
    %638 = vmatpush1.bf16.msra.mxu0 0
    %639 = vmatprep.subr.bf16.mxu0 0
    %640 = vmatpush1.bf16.msra.mxu0 %v246
    %641 = vmatprep.subr.bf16.mxu0 0
    %642 = vmatpush1.bf16.msra.mxu0 %v245
    %643 = vmatprep.subr.bf16.mxu0 0
    %644 = vmatpush2.bf16.msra.mxu0 0
    %645 = vmatprep.subr.bf16.mxu0 0
    %646 = vmatpush2.bf16.msra.mxu0 0
    %647 = vmatprep.subr.bf16.mxu0 0
    %648 = vmatpush2.bf16.msra.mxu0 0
    %649 = vmatprep.subr.bf16.mxu0 0
    %650 = vmatpush2.bf16.msra.mxu0 0
    %651 = vmatprep.subr.bf16.mxu0 0
    %652 = vmatpush2.bf16.msra.mxu0 0
    %653 = vmatprep.subr.bf16.mxu0 0
    %654 = vmatpush2.bf16.msra.mxu0 0
    %655 = vmatprep.subr.bf16.mxu0 0
    %656 = vmatpush2.bf16.msra.mxu0 0
    %657 = vmatprep.subr.bf16.mxu0 0
    %658 = vmatpush2.bf16.msra.mxu0 0
    %659 = vmatprep.mubr.bf16.mxu0 0
    %660 = vmatmul.mubr.bf16.gmra.mxu0 %v604
    %v661 = vpop.f32.mrf.mxu0
    %v662 = vadd.f32 %v235, %v661
    %v663 = vpop.f32.mrf.mxu0
    %v664 = vpop.f32.mrf.mxu0
    %v665 = vadd.f32 %v235, %v664
    %v666 = vpop.f32.mrf.mxu0
    %667 = vmatprep.mubr.bf16.mxu0 0
    %668 = vmatmul.mubr.bf16.gmra.mxu0 %v607
    %v669 = vpop.f32.mrf.mxu0
    %v670 = vadd.f32 %v235, %v669
    %v671 = vpop.f32.mrf.mxu0
    %v672 = vpop.f32.mrf.mxu0
    %v673 = vadd.f32 %v235, %v672
    %v674 = vpop.f32.mrf.mxu0
    %675 = vmatprep.mubr.bf16.mxu0 0
    %676 = vmatmul.mubr.bf16.gmra.mxu0 %v610
    %v677 = vpop.f32.mrf.mxu0
    %v678 = vadd.f32 %v235, %v677
    %v679 = vpop.f32.mrf.mxu0
    %v680 = vpop.f32.mrf.mxu0
    %v681 = vadd.f32 %v235, %v680
    %v682 = vpop.f32.mrf.mxu0
    %683 = vmatprep.mubr.bf16.mxu0 0
    %684 = vmatmul.mubr.bf16.gmra.mxu0 %v613
    %v685 = vpop.f32.mrf.mxu0
    %v686 = vadd.f32 %v235, %v685
    %v687 = vpop.f32.mrf.mxu0
    %v688 = vpop.f32.mrf.mxu0
    %v689 = vadd.f32 %v235, %v688
    %v690 = vpop.f32.mrf.mxu0
    %691 = vmatprep.mubr.bf16.mxu0 0
    %692 = vmatmul.mubr.bf16.gmra.mxu0 %v616
    %v693 = vpop.f32.mrf.mxu0
    %v694 = vadd.f32 %v235, %v693
    %v695 = vpop.f32.mrf.mxu0
    %v696 = vpop.f32.mrf.mxu0
    %v697 = vadd.f32 %v235, %v696
    %v698 = vpop.f32.mrf.mxu0
    %699 = vmatprep.mubr.bf16.mxu0 0
    %700 = vmatmul.mubr.bf16.gmra.mxu0 %v619
    %v701 = vpop.f32.mrf.mxu0
    %v702 = vadd.f32 %v235, %v701
    %v703 = vpop.f32.mrf.mxu0
    %v704 = vpop.f32.mrf.mxu0
    %v705 = vadd.f32 %v235, %v704
    %v706 = vpop.f32.mrf.mxu0
    %707 = vmatprep.mubr.bf16.mxu0 0
    %708 = vmatmul.mubr.bf16.gmra.mxu0 %v622
    %v709 = vpop.f32.mrf.mxu0
    %v710 = vadd.f32 %v235, %v709
    %v711 = vpop.f32.mrf.mxu0
    %v712 = vpop.f32.mrf.mxu0
    %v713 = vadd.f32 %v235, %v712
    %v714 = vpop.f32.mrf.mxu0
    %715 = vmatprep.mubr.bf16.mxu0 0
    %716 = vmatmul.mubr.bf16.gmra.mxu0 %v625
    %v717 = vpop.f32.mrf.mxu0
    %v718 = vadd.f32 %v235, %v717
    %v719 = vpop.f32.mrf.mxu0
    %v720 = vpop.f32.mrf.mxu0
    %v721 = vadd.f32 %v235, %v720
    %v722 = vpop.f32.mrf.mxu0
    %723 = vdwg.mxu0
    %v724 = vmax.f32 %v662, 0.0
    %v725 = vmax.f32 %v665, 0.0
    %v726 = vmax.f32 %v670, 0.0
    %v727 = vmax.f32 %v673, 0.0
    %v728 = vmax.f32 %v678, 0.0
    %v729 = vmax.f32 %v681, 0.0
    %v730 = vmax.f32 %v686, 0.0
    %v731 = vmax.f32 %v689, 0.0
    %v732 = vmax.f32 %v694, 0.0
    %v733 = vmax.f32 %v697, 0.0
    %v734 = vmax.f32 %v702, 0.0
    %v735 = vmax.f32 %v705, 0.0
    %v736 = vmax.f32 %v710, 0.0
    %v737 = vmax.f32 %v713, 0.0
    %v738 = vmax.f32 %v718, 0.0
    %v739 = vmax.f32 %v721, 0.0
    %v740 = vmax.f32 %v724, %v726
    %v741 = vmax.f32 %v725, %v727
    %v742 = vmax.f32 %v740, %v728
    %v743 = vmax.f32 %v741, %v729
    %v744 = vmax.f32 %v742, %v730
    %v745 = vmax.f32 %v743, %v731
    %v746 = vmax.f32 %v744, %v732
    %v747 = vmax.f32 %v745, %v733
    %v748 = vmax.f32 %v746, %v734
    %v749 = vmax.f32 %v747, %v735
    %v750 = vmax.f32 %v748, %v736
    %v751 = vmax.f32 %v749, %v737
    %v752 = vmax.f32 %v750, %v738
    %v753 = vmax.f32 %v751, %v739
    %756 = vrot.lane.b32.xlu0 %v752, 32
    %v757 = vpop.permute.xlu0 %756
    %758 = vrot.lane.b32.xlu0 %v753, 32
    %v759 = vpop.permute.xlu0 %758
    %v762 = vsel %vm249, %v399, %v757
    %v763 = vsel %vm249, %v400, %v759
    %vm764 = vcmask 523264
    %765 = vst.msk [vmem:[#allocation2] sm:$0xff] %vm764, %v762
    %766 = vst.msk [vmem:[#allocation2 + $0x8] sm:$0xff] %vm764, %v763
    // Predicated region
    $region18: #{tpu_custom_call.1} parent=1 // pred_check
      _
    $region19: #{tpu_custom_call.1} parent=1 // pred_check_branch
      %768 = sbr.rel (0) target = $region21
    $region20: #{tpu_custom_call.1} parent=1 // pred_region
      %s770 = ssub.s32 256, 256
      %771 = vsyncadd [#allocation3], %s770
      %s772 = sshll.u32 [#allocation2], 4
      %s773 = int_to_ptr.vmem [resolvable:$true] %s772
      %778 = dma.vmem_to_hbm [thread:$0]  %s773, 256, %s4, [#allocation3], 128, 128, 8
    $region21: #{tpu_custom_call.1} parent=1 // pred_fallthru
      _
    // Predicated region
    $region22: #{tpu_custom_call.1} parent=1 // pred_check
      _
    $region23: #{tpu_custom_call.1} parent=1 // pred_check_branch
      %780 = sbr.rel (0) target = $region25
    $region24: #{tpu_custom_call.1} parent=1 // pred_region
      %781 = dma.done [#allocation3], 256
    $region25: #{tpu_custom_call.1} parent=1 // pred_fallthru
      _
    %782 = vsyncpa [#allocation3], 1

</llo_original>
